<compile_context>
chip_gen: v7x
topology: tpu7x:2x2x1
jax: 0.10.0
libtpu: 0.0.40
codegen_flags: <defaults>
</compile_context>

<pallas_src>
import functools
import math

import jax
import jax.numpy as jnp
from jax import lax
from jax.experimental import pallas as pl
from jax.experimental.pallas import tpu as pltpu


# ---------------------------------------------------------------------------
# wrapper-side helpers (tiny arrays only)
# ---------------------------------------------------------------------------
def _bilinear_matrix(n_in, n_out, dtype=jnp.float32):
    """Interp matrix M (n_out, n_in): out = M @ in, bilinear, align_corners=True."""
    if n_out == 1 or n_in == 1:
        return jnp.zeros((n_out, n_in), dtype).at[:, 0].set(1.0)
    src = jnp.arange(n_out, dtype=jnp.float32) * (n_in - 1) / (n_out - 1)
    i0 = jnp.clip(jnp.floor(src).astype(jnp.int32), 0, n_in - 2)
    frac = src - i0.astype(jnp.float32)
    m = ((1.0 - frac)[:, None] * jax.nn.one_hot(i0, n_in, dtype=jnp.float32)
         + frac[:, None] * jax.nn.one_hot(i0 + 1, n_in, dtype=jnp.float32))
    return m.astype(dtype)


def _pick_block_batch(n, per_image_bytes, vmem_budget=2 << 20):
    """Largest divisor of n that keeps >=2 grid steps and a small per-step block."""
    cap = max(1, vmem_budget // max(per_image_bytes, 1))
    divisors = [d for d in range(1, n + 1) if n % d == 0 and d <= cap]
    multi = [d for d in divisors if n // d >= 2]
    return max(multi) if multi else max(divisors)


# ---------------------------------------------------------------------------
# kernel
# ---------------------------------------------------------------------------
def _upconv_kernel(x_ref, b_ref, g_ref, shift_ref, o_ref, *, k, hc, tb):
    # Hoisted (grid-invariant) loads: one per kernel body, reused by every image.
    b_mat = b_ref[...]                          # (k*Hc, H)  stacked H-interp+row-tap
    shift = shift_ref[...]                      # (1, Wc*Cout) conv bias + BN shift
    g_taps = [g_ref[dy] for dy in range(k)]     # k x (W*Cin, Wc*Cout)

    for b in range(tb):                         # static unroll over images in block
        x2 = x_ref[b]                           # (H, W*Cin) channels-last slab
        # H-axis bilinear upsample + conv row-taps (+ zero-pad folded in): 1 matmul
        t = jnp.dot(b_mat, x2, preferred_element_type=jnp.float32)  # (k*Hc, W*Cin)
        # W-upsample + conv col-taps + channel mix + BN scale: k matmuls whose LHS
        # slices start at multiples of Hc (sublane-aligned here).
        acc = jnp.dot(t[0:hc, :], g_taps[0], preferred_element_type=jnp.float32)
        for dy in range(1, k):
            acc = acc + jnp.dot(t[dy * hc:(dy + 1) * hc, :], g_taps[dy],
                                preferred_element_type=jnp.float32)
        z = acc + shift
        # ELU(alpha=1)
        y = jnp.where(z > 0, z, jnp.exp(jnp.minimum(z, 0.0)) - 1.0)
        o_ref[b] = y.astype(o_ref.dtype)


# ---------------------------------------------------------------------------
# wrapper
# ---------------------------------------------------------------------------
def upconv_pallas(x, conv_w, conv_b, bn_gamma, bn_beta, bn_mean, bn_var,
                  *, scale, kernel_size, eps=1e-5):
    n, cin, h, w = x.shape
    cout = conv_w.shape[0]
    k = kernel_size
    p = (k - 1) // 2
    ho, wo = int(math.floor(h * scale)), int(math.floor(w * scale))
    hc = ho + 2 * p - k + 1                 # conv output height (stride 1)
    wc = wo + 2 * p - k + 1                 # conv output width

    f32 = jnp.float32
    # --- fold eval-mode BN into conv weight / bias --------------------------
    s = (bn_gamma / jnp.sqrt(bn_var + eps)).astype(f32)             # (Cout,)
    w_s = conv_w.astype(f32) * s[:, None, None, None]               # (Cout,Cin,k,k)
    shift = (conv_b.astype(f32) - bn_mean.astype(f32)) * s + bn_beta.astype(f32)
    shift_row = jnp.tile(shift, wc).reshape(1, wc * cout)           # (1, Wc*Cout)

    # --- interpolation matrices (zero rows == conv zero padding) ------------
    a_h = _bilinear_matrix(h, ho, f32)                              # (Ho, H)
    a_w = _bilinear_matrix(w, wo, f32)                              # (Wo, W)
    a_h_pad = jnp.pad(a_h, ((p, p), (0, 0)))                        # (Ho+2p, H)
    a_w_pad = jnp.pad(a_w, ((p, p), (0, 0)))                        # (Wo+2p, W)

    # Stack the k row-tap views of A_h so the kernel's stage-2 slices start at
    # multiples of Hc (sublane-aligned) instead of offsets 0..k-1.
    b_stack = jnp.concatenate([a_h_pad[dy:dy + hc, :] for dy in range(k)],
                              axis=0)                               # (k*Hc, H)

    # --- fused "W-interp + conv dx-tap + channel mix" matrices G[dy] --------
    # G[dy, w*Cin+ci, v*Cout+co] = sum_dx A_w_pad[v+dx, w] * W_s[co, ci, dy, dx]
    s_tap = jnp.stack([a_w_pad[dx:dx + wc, :] for dx in range(k)], axis=0)  # (k,Wc,W)
    g5 = jnp.einsum('xvw,oiyx->ywivo', s_tap, w_s,
                    precision=lax.Precision.HIGHEST)                # (k,W,Cin,Wc,Cout)
    g = g5.reshape(k, w * cin, wc * cout).astype(f32)

    # --- channels-last 2-D slabs (layout plumbing only) ----------------------
    x2 = jnp.transpose(x, (0, 2, 3, 1)).reshape(n, h, w * cin).astype(f32)

    tb = _pick_block_batch(n, (h * w * cin + k * hc * w * cin + hc * wc * cout) * 4)
    grid = (n // tb,)

    kern = functools.partial(_upconv_kernel, k=k, hc=hc, tb=tb)
    out2 = pl.pallas_call(
        kern,
        out_shape=jax.ShapeDtypeStruct((n, hc, wc * cout), f32),
        grid=grid,
        in_specs=[
            pl.BlockSpec((tb, h, w * cin), lambda g_: (g_, 0, 0)),
            pl.BlockSpec((k * hc, h), lambda g_: (0, 0)),
            pl.BlockSpec((k, w * cin, wc * cout), lambda g_: (0, 0, 0)),
            pl.BlockSpec((1, wc * cout), lambda g_: (0, 0)),
        ],
        out_specs=pl.BlockSpec((tb, hc, wc * cout), lambda g_: (g_, 0, 0)),
        compiler_params=pltpu.CompilerParams(dimension_semantics=("parallel",)),
    )(x2, b_stack, g, shift_row)

    # back to NCHW to match the PyTorch module
    return out2.reshape(n, hc, wc, cout).transpose(0, 3, 1, 2).astype(x.dtype)


# ---------------------------------------------------------------------------
# pure-JAX reference (same semantics: bilinear align_corners=True, conv, eval-BN, ELU)
# ---------------------------------------------------------------------------
def upconv_ref(x, conv_w, conv_b, bn_gamma, bn_beta, bn_mean, bn_var,
               *, scale, kernel_size, eps=1e-5):
    n, cin, h, w = x.shape
    k = kernel_size
    p = (k - 1) // 2
    ho, wo = int(math.floor(h * scale)), int(math.floor(w * scale))
    a_h = _bilinear_matrix(h, ho)
    a_w = _bilinear_matrix(w, wo)
    u = jnp.einsum('oh,nchw->ncow', a_h, x.astype(jnp.float32),
                   precision=lax.Precision.HIGHEST)
    u = jnp.einsum('vw,ncow->ncov', a_w, u, precision=lax.Precision.HIGHEST)
    y = lax.conv_general_dilated(
        u, conv_w.astype(jnp.float32), window_strides=(1, 1),
        padding=[(p, p), (p, p)],
        dimension_numbers=('NCHW', 'OIHW', 'NCHW'),
        precision=lax.Precision.HIGHEST)
    y = y + conv_b[None, :, None, None]
    y = (y - bn_mean[None, :, None, None]) / jnp.sqrt(bn_var[None, :, None, None] + eps)
    y = y * bn_gamma[None, :, None, None] + bn_beta[None, :, None, None]
    return jnp.where(y > 0, y, jnp.expm1(y)).astype(x.dtype)


if __name__ == "__main__":
    key = jax.random.PRNGKey(0)
    kx, kw, kb, kg, kbe, km, kv = jax.random.split(key, 7)

    n, cin, cout, h, w = 2, 4, 8, 16, 16
    ksize, scale = 3, 2

    x = jax.random.normal(kx, (n, cin, h, w), dtype=jnp.float32)
    conv_w = jax.random.normal(kw, (cout, cin, ksize, ksize), jnp.float32) * 0.1
    conv_b = jax.random.normal(kb, (cout,), jnp.float32) * 0.1
    bn_gamma = 1.0 + 0.1 * jax.random.normal(kg, (cout,), jnp.float32)
    bn_beta = 0.1 * jax.random.normal(kbe, (cout,), jnp.float32)
    bn_mean = 0.1 * jax.random.normal(km, (cout,), jnp.float32)
    bn_var = jnp.abs(1.0 + 0.1 * jax.random.normal(kv, (cout,), jnp.float32))

    y = jax.block_until_ready(
        upconv_pallas(x, conv_w, conv_b, bn_gamma, bn_beta, bn_mean, bn_var,
                      scale=scale, kernel_size=ksize))
    y_ref = upconv_ref(x, conv_w, conv_b, bn_gamma, bn_beta, bn_mean, bn_var,
                       scale=scale, kernel_size=ksize)

    assert y.shape == y_ref.shape, (y.shape, y_ref.shape)
    err = float(jnp.max(jnp.abs(y - y_ref)))
    assert jnp.allclose(y, y_ref, atol=1e-2, rtol=1e-2), err
    print("KERNEL_OK")
</pallas_src>

<mosaic_0001>
module attributes {stable_mosaic.version = 11 : i64} {
  func.func @_upconv_kernel(%arg0: i32, %arg1: memref<1x16x64xf32, #tpu.memory_space<vmem>>, %arg2: memref<96x16xf32, #tpu.memory_space<vmem>>, %arg3: memref<3x64x256xf32, #tpu.memory_space<vmem>>, %arg4: memref<1x256xf32, #tpu.memory_space<vmem>>, %arg5: memref<1x32x256xf32, #tpu.memory_space<vmem>>) attributes {dimension_semantics = [#tpu.dimension_semantics<parallel>], iteration_bounds = array<i64: 2>, scalar_prefetch = 0 : i64, scratch_operands = 0 : i64, tpu.core_type = #tpu.core_type<tc>, window_params = [{transform_indices = @transform_0, window_bounds = array<i64: 1, 16, 64>}, {pipeline_mode = #tpu.pipeline_mode<synchronous>, transform_indices = @transform_1, window_bounds = array<i64: 96, 16>}, {pipeline_mode = #tpu.pipeline_mode<synchronous>, transform_indices = @transform_2, window_bounds = array<i64: 3, 64, 256>}, {pipeline_mode = #tpu.pipeline_mode<synchronous>, transform_indices = @transform_3, window_bounds = array<i64: 1, 256>}, {transform_indices = @transform_4, window_bounds = array<i64: 1, 32, 256>}]} {
    %c0 = arith.constant 0 : index
    %c0_0 = arith.constant 0 : index
    %0 = vector.load %arg2[%c0, %c0_0] : memref<96x16xf32, #tpu.memory_space<vmem>>, vector<96x16xf32>
    %c0_1 = arith.constant 0 : index
    %c0_2 = arith.constant 0 : index
    %1 = vector.load %arg4[%c0_1, %c0_2] : memref<1x256xf32, #tpu.memory_space<vmem>>, vector<1x256xf32>
    %c0_3 = arith.constant 0 : index
    %c0_4 = arith.constant 0 : index
    %c0_5 = arith.constant 0 : index
    %2 = vector.load %arg3[%c0_3, %c0_4, %c0_5] : memref<3x64x256xf32, #tpu.memory_space<vmem>>, vector<1x64x256xf32>
    %3 = vector.shape_cast %2 : vector<1x64x256xf32> to vector<64x256xf32>
    %c1 = arith.constant 1 : index
    %c0_6 = arith.constant 0 : index
    %c0_7 = arith.constant 0 : index
    %4 = vector.load %arg3[%c1, %c0_6, %c0_7] : memref<3x64x256xf32, #tpu.memory_space<vmem>>, vector<1x64x256xf32>
    %5 = vector.shape_cast %4 : vector<1x64x256xf32> to vector<64x256xf32>
    %c2 = arith.constant 2 : index
    %c0_8 = arith.constant 0 : index
    %c0_9 = arith.constant 0 : index
    %6 = vector.load %arg3[%c2, %c0_8, %c0_9] : memref<3x64x256xf32, #tpu.memory_space<vmem>>, vector<1x64x256xf32>
    %7 = vector.shape_cast %6 : vector<1x64x256xf32> to vector<64x256xf32>
    %c0_10 = arith.constant 0 : index
    %c0_11 = arith.constant 0 : index
    %c0_12 = arith.constant 0 : index
    %8 = vector.load %arg1[%c0_10, %c0_11, %c0_12] : memref<1x16x64xf32, #tpu.memory_space<vmem>>, vector<1x16x64xf32>
    %9 = vector.shape_cast %8 : vector<1x16x64xf32> to vector<16x64xf32>
    %cst = arith.constant dense<0.000000e+00> : vector<96x64xf32>
    %10 = tpu.matmul %0, %9, %cst {dimension_numbers = #tpu.dot_dimension_numbers<[1], [0], [0], [1], [0, 0, 1, 1], [], []>} : vector<96x16xf32>, vector<16x64xf32>, vector<96x64xf32> -> vector<96x64xf32>
    %11 = vector.extract_strided_slice %10 {offsets = [0, 0], sizes = [32, 64], strides = [1, 1]} : vector<96x64xf32> to vector<32x64xf32>
    %cst_13 = arith.constant dense<0.000000e+00> : vector<32x256xf32>
    %12 = tpu.matmul %11, %3, %cst_13 {dimension_numbers = #tpu.dot_dimension_numbers<[1], [0], [0], [1], [0, 0, 1, 1], [], []>} : vector<32x64xf32>, vector<64x256xf32>, vector<32x256xf32> -> vector<32x256xf32>
    %13 = vector.extract_strided_slice %10 {offsets = [32, 0], sizes = [32, 64], strides = [1, 1]} : vector<96x64xf32> to vector<32x64xf32>
    %cst_14 = arith.constant dense<0.000000e+00> : vector<32x256xf32>
    %14 = tpu.matmul %13, %5, %cst_14 {dimension_numbers = #tpu.dot_dimension_numbers<[1], [0], [0], [1], [0, 0, 1, 1], [], []>} : vector<32x64xf32>, vector<64x256xf32>, vector<32x256xf32> -> vector<32x256xf32>
    %15 = arith.addf %12, %14 : vector<32x256xf32>
    %16 = vector.extract_strided_slice %10 {offsets = [64, 0], sizes = [32, 64], strides = [1, 1]} : vector<96x64xf32> to vector<32x64xf32>
    %cst_15 = arith.constant dense<0.000000e+00> : vector<32x256xf32>
    %17 = tpu.matmul %16, %7, %cst_15 {dimension_numbers = #tpu.dot_dimension_numbers<[1], [0], [0], [1], [0, 0, 1, 1], [], []>} : vector<32x64xf32>, vector<64x256xf32>, vector<32x256xf32> -> vector<32x256xf32>
    %18 = arith.addf %15, %17 : vector<32x256xf32>
    %19 = vector.broadcast %1 : vector<1x256xf32> to vector<32x256xf32>
    %20 = arith.addf %18, %19 : vector<32x256xf32>
    %cst_16 = arith.constant 0.000000e+00 : f32
    %21 = vector.broadcast %cst_16 : f32 to vector<32x256xf32>
    %22 = arith.cmpf ogt, %20, %21 : vector<32x256xf32>
    %cst_17 = arith.constant 0.000000e+00 : f32
    %23 = vector.broadcast %cst_17 : f32 to vector<32x256xf32>
    %24 = arith.minimumf %20, %23 : vector<32x256xf32>
    %25 = math.exp %24 : vector<32x256xf32>
    %cst_18 = arith.constant 1.000000e+00 : f32
    %26 = vector.broadcast %cst_18 : f32 to vector<32x256xf32>
    %27 = arith.subf %25, %26 : vector<32x256xf32>
    %28 = arith.select %22, %20, %27 : vector<32x256xi1>, vector<32x256xf32>
    %c0_19 = arith.constant 0 : index
    %c0_20 = arith.constant 0 : index
    %c0_21 = arith.constant 0 : index
    %29 = vector.load %arg5[%c0_19, %c0_20, %c0_21] : memref<1x32x256xf32, #tpu.memory_space<vmem>>, vector<1x32x256xf32>
    %30 = vector.shape_cast %29 : vector<1x32x256xf32> to vector<32x256xf32>
    %31 = vector.shape_cast %28 : vector<32x256xf32> to vector<1x32x256xf32>
    tpu.vector_store %arg5[%c0_19, %c0_20, %c0_21], %31 {strides = array<i32>} : memref<1x32x256xf32, #tpu.memory_space<vmem>>, vector<1x32x256xf32>,
    return
  }
  func.func @transform_0(%arg0: i32) -> (i32, i32, i32) {
    %c0_i32 = arith.constant 0 : i32
    %c0_i32_0 = arith.constant 0 : i32
    %c0_i32_1 = arith.constant 0 : i32
    return %arg0, %c0_i32, %c0_i32_0 : i32, i32, i32
  }
  func.func @transform_1(%arg0: i32) -> (i32, i32) {
    %c0_i32 = arith.constant 0 : i32
    %c0_i32_0 = arith.constant 0 : i32
    %c0_i32_1 = arith.constant 0 : i32
    return %c0_i32, %c0_i32_0 : i32, i32
  }
  func.func @transform_2(%arg0: i32) -> (i32, i32, i32) {
    %c0_i32 = arith.constant 0 : i32
    %c0_i32_0 = arith.constant 0 : i32
    %c0_i32_1 = arith.constant 0 : i32
    %c0_i32_2 = arith.constant 0 : i32
    return %c0_i32, %c0_i32_0, %c0_i32_1 : i32, i32, i32
  }
  func.func @transform_3(%arg0: i32) -> (i32, i32) {
    %c0_i32 = arith.constant 0 : i32
    %c0_i32_0 = arith.constant 0 : i32
    %c0_i32_1 = arith.constant 0 : i32
    return %c0_i32, %c0_i32_0 : i32, i32
  }
  func.func @transform_4(%arg0: i32) -> (i32, i32, i32) {
    %c0_i32 = arith.constant 0 : i32
    %c0_i32_0 = arith.constant 0 : i32
    %c0_i32_1 = arith.constant 0 : i32
    return %arg0, %c0_i32, %c0_i32_0 : i32, i32, i32
  }
}

</mosaic_0001>

<llo_original>
// kernel: tpu_custom_call.1
$region0: #{tpu_custom_call.1}
  #allocation0 [shape = 'u32[]', space=smem, size = 0x4, offset = 0x4, fixed_abs, tag = 'smem constant byte address 0x4 - core index']
  #allocation1 [shape = 'u32[144,128]{1,0:T(1,128)}', space=vmem, size = 0x12000, scoped, tag = 'internal scratch']
  %s0 = inlined_call_operand.vmem [shape: f32[2,16,64], index: 0, kind: input, shape index: {}]
  %s1 = inlined_call_operand.vmem [shape: f32[96,16], index: 1, kind: input, shape index: {}]
  %s2 = inlined_call_operand.hbm [shape: f32[3,64,256], index: 2, kind: input, shape index: {}]
  %s3 = inlined_call_operand.vmem [shape: f32[1,256], index: 3, kind: input, shape index: {}]
  %s4 = inlined_call_operand.hbm [shape: f32[2,32,256], index: 4, kind: output, shape index: {}]
  %s5 = sld [smem:[#allocation0]]
  $region53: #{tpu_custom_call.1} parent=0
    _
  %s7 = ssub.s32 1, %s5
  %s8 = scalar_select 0, %s7, %s5
  $region1: #{tpu_custom_call.1} parent=0
    #allocation2 [shape = 'u8[196608]{0}', space=vmem, size = 0x30000, scoped, tag = 'input window, operand 2, single buffered']
    #allocation3 [shape = 's32[2]{0}', space=sflag, size = 0x8, scoped, tag = 'scoped memory for tpu_custom_call.1']
    #allocation4 [shape = 's32[2]{0}', space=sflag, size = 0x8, scoped, tag = 'scoped memory for tpu_custom_call.1']
    #allocation5 [shape = 'u8[65536]{0}', space=vmem, size = 0x10000, scoped, tag = 'output window, operand 0']
    %9 = vsyncpa [#allocation3], 0
    %10 = vsyncpa [#allocation4], 0
    %s11 = scalar_lea.sflag [#allocation4], 1
    %12 = vsyncpa %s11, 0
    loop: start=0, step=1, limit=4
    $region2: #{tpu_custom_call.1} parent=1 // loop_pre_header
      _
    $region3: #{tpu_custom_call.1} parent=1 // loop_header
      %s14 = sphi 0, %s18
      %p15 = scmp.ge.s32.totalorder %s14, 4
      %s24 = sphi 0, %s26
      %s27 = sphi 0, %s24
      %s28 = sphi 0, %s27
      %s44 = sphi 0, %s28
      %s48 = sphi 0, %s48
      %s50 = sphi 0, %s48
      %s51 = sphi 0, %s50
      %s65 = sphi 0, %s51
      %s69 = sphi 0, %s69
      %s71 = sphi 0, %s69
      %s72 = sphi 0, %s71
      %s86 = sphi 0, %s72
      %s90 = sphi 0, %s90
      %s92 = sphi 0, %s90
      %s93 = sphi 0, %s92
      %s107 = sphi 0, %s93
      %s113 = sphi 0, %s115
      %s116 = sphi 0, %s113
      %s117 = sphi 0, %s116
      %s133 = sphi 0, %s117
    $region4: #{tpu_custom_call.1} parent=1 // loop_header_branch
      %17 = sbr.rel (%p15) target = $region8
    $region5: #{tpu_custom_call.1} parent=1 // loop_body
      %s19 = ssub.s32 %s14, 1
      %s20 = ssub.s32 %s14, 2
      %s21 = sadd.s32 %s14, 1
      %s22 = ssub.s32 %s14, %s21
      %p23 = scmp.eq.s32.totalorder %s22, 0
      %s25 = sadd.s32 %s24, 1
      %s26 = scalar_select %p23, %s24, %s25
      %p29 = pneg %p23
      %p30 = scmp.eq.s32.totalorder %s14, 1
      %p31 = por %p29, %p30
      %p32 = scmp.ne.s32.totalorder %s24, %s27
      %p33 = scmp.eq.s32.totalorder %s14, 0
      %p34 = por %p32, %p33
      %p35 = scmp.ne.s32.totalorder %s24, %s27
      %p36 = scmp.eq.s32.totalorder %s19, 1
      %p37 = por %p35, %p36
      %p38 = scmp.ne.s32.totalorder %s27, %s28
      %p39 = scmp.eq.s32.totalorder %s19, 0
      %p40 = por %p38, %p39
      %p41 = scmp.ne.s32.totalorder %s27, %s28
      %p42 = scmp.eq.s32.totalorder %s20, 1
      %p43 = por %p41, %p42
      %p45 = scmp.ne.s32.totalorder %s28, %s44
      %p46 = scmp.eq.s32.totalorder %s20, 0
      %p47 = por %p45, %p46
      %s49 = sadd.s32 %s48, 1
      %p52 = scmp.eq.s32.totalorder %s14, 1
      %p53 = scmp.ne.s32.totalorder %s48, %s50
      %p54 = scmp.eq.s32.totalorder %s14, 0
      %p55 = por %p53, %p54
      %p56 = scmp.ne.s32.totalorder %s48, %s50
      %p57 = scmp.eq.s32.totalorder %s19, 1
      %p58 = por %p56, %p57
      %p59 = scmp.ne.s32.totalorder %s50, %s51
      %p60 = scmp.eq.s32.totalorder %s19, 0
      %p61 = por %p59, %p60
      %p62 = scmp.ne.s32.totalorder %s50, %s51
      %p63 = scmp.eq.s32.totalorder %s20, 1
      %p64 = por %p62, %p63
      %p66 = scmp.ne.s32.totalorder %s51, %s65
      %p67 = scmp.eq.s32.totalorder %s20, 0
      %p68 = por %p66, %p67
      %s70 = sadd.s32 %s69, 1
      %p73 = scmp.eq.s32.totalorder %s14, 1
      %p74 = scmp.ne.s32.totalorder %s69, %s71
      %p75 = scmp.eq.s32.totalorder %s14, 0
      %p76 = por %p74, %p75
      %p77 = scmp.ne.s32.totalorder %s69, %s71
      %p78 = scmp.eq.s32.totalorder %s19, 1
      %p79 = por %p77, %p78
      %p80 = scmp.ne.s32.totalorder %s71, %s72
      %p81 = scmp.eq.s32.totalorder %s19, 0
      %p82 = por %p80, %p81
      %p83 = scmp.ne.s32.totalorder %s71, %s72
      %p84 = scmp.eq.s32.totalorder %s20, 1
      %p85 = por %p83, %p84
      %p87 = scmp.ne.s32.totalorder %s72, %s86
      %p88 = scmp.eq.s32.totalorder %s20, 0
      %p89 = por %p87, %p88
      %s91 = sadd.s32 %s90, 1
      %p94 = scmp.eq.s32.totalorder %s14, 1
      %p95 = scmp.ne.s32.totalorder %s90, %s92
      %p96 = scmp.eq.s32.totalorder %s14, 0
      %p97 = por %p95, %p96
      %p98 = scmp.ne.s32.totalorder %s90, %s92
      %p99 = scmp.eq.s32.totalorder %s19, 1
      %p100 = por %p98, %p99
      %p101 = scmp.ne.s32.totalorder %s92, %s93
      %p102 = scmp.eq.s32.totalorder %s19, 0
      %p103 = por %p101, %p102
      %p104 = scmp.ne.s32.totalorder %s92, %s93
      %p105 = scmp.eq.s32.totalorder %s20, 1
      %p106 = por %p104, %p105
      %p108 = scmp.ne.s32.totalorder %s93, %s107
      %p109 = scmp.eq.s32.totalorder %s20, 0
      %p110 = por %p108, %p109
      %s111 = ssub.s32 %s14, %s21
      %p112 = scmp.eq.s32.totalorder %s111, 0
      %s114 = sadd.s32 %s113, 1
      %s115 = scalar_select %p112, %s113, %s114
      %p118 = pneg %p112
      %p119 = scmp.eq.s32.totalorder %s14, 1
      %p120 = por %p118, %p119
      %p121 = scmp.ne.s32.totalorder %s113, %s116
      %p122 = scmp.eq.s32.totalorder %s14, 0
      %p123 = por %p121, %p122
      %p124 = scmp.ne.s32.totalorder %s113, %s116
      %p125 = scmp.eq.s32.totalorder %s19, 1
      %p126 = por %p124, %p125
      %p127 = scmp.ne.s32.totalorder %s116, %s117
      %p128 = scmp.eq.s32.totalorder %s19, 0
      %p129 = por %p127, %p128
      %p130 = scmp.ne.s32.totalorder %s116, %s117
      %p131 = scmp.eq.s32.totalorder %s20, 1
      %p132 = por %p130, %p131
      %p134 = scmp.ne.s32.totalorder %s117, %s133
      %p135 = scmp.eq.s32.totalorder %s20, 0
      %p136 = por %p134, %p135
      %p137 = scmp.le.s32.totalorder 1, %s14
      %p138 = scmp.lt.s32.totalorder %s14, 3
      %p139 = pnand %p137, %p138
      %p140 = pneg %p139
      // Predicated region
      $region9: #{tpu_custom_call.1} parent=5 // pred_check
        _
      $region10: #{tpu_custom_call.1} parent=5 // pred_check_branch
        %142 = sbr.rel (%p139) target = $region12
      $region11: #{tpu_custom_call.1} parent=5 // pred_region
        %s143 = ssub.s32 %s14, 1
        // Predicated region
        $region13: #{tpu_custom_call.1} parent=11 // pred_check
          %p144 = pneg %p61
        $region14: #{tpu_custom_call.1} parent=11 // pred_check_branch
          %146 = sbr.rel (%p144) target = $region16
        $region15: #{tpu_custom_call.1} parent=11 // pred_region
          _
        $region16: #{tpu_custom_call.1} parent=11 // pred_fallthru
          _
        // Predicated region
        $region17: #{tpu_custom_call.1} parent=11 // pred_check
          %p147 = pneg %p82
        $region18: #{tpu_custom_call.1} parent=11 // pred_check_branch
          %149 = sbr.rel (%p147) target = $region20
        $region19: #{tpu_custom_call.1} parent=11 // pred_region
          %s151 = ssub.s32 6144, 6144
          %152 = vsyncadd [#allocation3], %s151
          %s153 = sshll.u32 [#allocation2], 4
          %s154 = int_to_ptr.vmem [resolvable:$true] %s153
          %159 = dma.hbm_to_vmem [thread:$0]  %s2, 6144, %s154, [#allocation3], 256, 256, 16
        $region20: #{tpu_custom_call.1} parent=11 // pred_fallthru
          _
        // Predicated region
        $region21: #{tpu_custom_call.1} parent=11 // pred_check
          %p160 = pneg %p103
        $region22: #{tpu_custom_call.1} parent=11 // pred_check_branch
          %162 = sbr.rel (%p160) target = $region24
        $region23: #{tpu_custom_call.1} parent=11 // pred_region
          _
        $region24: #{tpu_custom_call.1} parent=11 // pred_fallthru
          _
      $region12: #{tpu_custom_call.1} parent=5 // pred_fallthru
        _
      %p163 = scmp.lt.s32.totalorder %s14, 2
      // Predicated region
      $region25: #{tpu_custom_call.1} parent=5 // pred_check
        %p164 = pneg %p163
      $region26: #{tpu_custom_call.1} parent=5 // pred_check_branch
        %166 = sbr.rel (%p164) target = $region28
      $region27: #{tpu_custom_call.1} parent=5 // pred_region
        // Predicated region
        $region29: #{tpu_custom_call.1} parent=27 // pred_check
          %p167 = pneg %p34
        $region30: #{tpu_custom_call.1} parent=27 // pred_check_branch
          %169 = sbr.rel (%p167) target = $region32
        $region31: #{tpu_custom_call.1} parent=27 // pred_region
          %p170 = scmp.lt.s32.totalorder %s14, 1
          %s171 = scalar_select %p170, %s14, 1
          %s172 = smul.addr %s171, 2
          %s173 = smul.addr %s172, 8
          %s174 = scalar_lea.vmem %s0, %s173
        $region32: #{tpu_custom_call.1} parent=27 // pred_fallthru
          _
      $region28: #{tpu_custom_call.1} parent=5 // pred_fallthru
        _
      %p175 = scmp.le.s32.totalorder 1, %s14
      %p176 = scmp.lt.s32.totalorder %s14, 3
      %p177 = pnand %p175, %p176
      %p178 = pneg %p177
      // Predicated region
      $region33: #{tpu_custom_call.1} parent=5 // pred_check
        _
      $region34: #{tpu_custom_call.1} parent=5 // pred_check_branch
        %180 = sbr.rel (%p177) target = $region36
      $region35: #{tpu_custom_call.1} parent=5 // pred_region
        %s181 = ssub.s32 %s14, 1
        // Predicated region
        $region37: #{tpu_custom_call.1} parent=35 // pred_check
          %p182 = pneg %p82
        $region38: #{tpu_custom_call.1} parent=35 // pred_check_branch
          %184 = sbr.rel (%p182) target = $region40
        $region39: #{tpu_custom_call.1} parent=35 // pred_region
          %185 = dma.done [#allocation3], 6144
        $region40: #{tpu_custom_call.1} parent=35 // pred_fallthru
          _
        %p186 = scmp.lt.s32.totalorder %s19, 1
        %s187 = scalar_select %p186, %s19, 1
        %s188 = smul.addr %s187, 2
        %s189 = smul.addr %s188, 8
        %s190 = scalar_lea.vmem %s0, %s189
        %p191 = pneg %p40
        %p192 = pneg %p37
        %p193 = pneg %p61
        %p194 = pneg %p58
        %p195 = pneg %p82
        %p196 = pneg %p79
        %p197 = pneg %p103
        %p198 = pneg %p100
        %p199 = pneg %p129
        %p200 = pneg %p126
        %s201 = sand.u32 %s116, 1
        %s202 = scalar_lea.sflag [#allocation4], %s201
        %s203 = sand.u32 %s116, 1
        %s204 = smul.addr %s203, 64
        %s205 = scalar_lea.vmem [#allocation5], %s204
        %p206 = scmp.lt.s32.totalorder %s19, 1
        %s207 = scalar_select %p206, %s19, 1
        %s208 = smul.addr %s207, 2
        %s209 = smul.addr %s208, 8
        %s210 = scalar_lea.vmem %s0, %s209
        %v211 = vld [vmem:[%s1] sm:$0xff]
        %v212 = vld [vmem:[%s1 + $0x8] sm:$0xff]
        %v213 = vld [vmem:[%s1 + $0x10] sm:$0xff]
        %v214 = vld [vmem:[%s1 + $0x18] sm:$0xff]
        %v215 = vld [vmem:[%s1 + $0x20] sm:$0xff]
        %v216 = vld [vmem:[%s1 + $0x28] sm:$0xff]
        %v217 = vld [vmem:[%s1 + $0x30] sm:$0xff]
        %v218 = vld [vmem:[%s1 + $0x38] sm:$0xff]
        %v219 = vld [vmem:[%s1 + $0x40] sm:$0xff]
        %v220 = vld [vmem:[%s1 + $0x48] sm:$0xff]
        %v221 = vld [vmem:[%s1 + $0x50] sm:$0xff]
        %v222 = vld [vmem:[%s1 + $0x58] sm:$0xff]
        %v223 = vld [vmem:[%s3] sm:$0x3]
        %v224 = vld [vmem:[#allocation2] sm:$0xff]
        %v225 = vld [vmem:[#allocation2 + $0x8] sm:$0xff]
        %v226 = vld [vmem:[#allocation2 + $0x10] sm:$0xff]
        %v227 = vld [vmem:[#allocation2 + $0x18] sm:$0xff]
        %v228 = vld [vmem:[#allocation2 + $0x20] sm:$0xff]
        %v229 = vld [vmem:[#allocation2 + $0x28] sm:$0xff]
        %v230 = vld [vmem:[#allocation2 + $0x30] sm:$0xff]
        %v231 = vld [vmem:[#allocation2 + $0x38] sm:$0xff]
        %v232 = vld [vmem:[#allocation2 + $0x40] sm:$0xff]
        %v233 = vld [vmem:[#allocation2 + $0x48] sm:$0xff]
        %v234 = vld [vmem:[#allocation2 + $0x50] sm:$0xff]
        %v235 = vld [vmem:[#allocation2 + $0x58] sm:$0xff]
        %v236 = vld [vmem:[#allocation2 + $0x60] sm:$0xff]
        %v237 = vld [vmem:[#allocation2 + $0x68] sm:$0xff]
        %v238 = vld [vmem:[#allocation2 + $0x70] sm:$0xff]
        %v239 = vld [vmem:[#allocation2 + $0x78] sm:$0xff]
        %s240 = scalar_lea.vmem [#allocation2], 128
        %v241 = vld [vmem:[%s240] sm:$0xff]
        %v242 = vld [vmem:[%s240 + $0x8] sm:$0xff]
        %v243 = vld [vmem:[%s240 + $0x10] sm:$0xff]
        %v244 = vld [vmem:[%s240 + $0x18] sm:$0xff]
        %v245 = vld [vmem:[%s240 + $0x20] sm:$0xff]
        %v246 = vld [vmem:[%s240 + $0x28] sm:$0xff]
        %v247 = vld [vmem:[%s240 + $0x30] sm:$0xff]
        %v248 = vld [vmem:[%s240 + $0x38] sm:$0xff]
        %v249 = vld [vmem:[%s240 + $0x40] sm:$0xff]
        %v250 = vld [vmem:[%s240 + $0x48] sm:$0xff]
        %v251 = vld [vmem:[%s240 + $0x50] sm:$0xff]
        %v252 = vld [vmem:[%s240 + $0x58] sm:$0xff]
        %v253 = vld [vmem:[%s240 + $0x60] sm:$0xff]
        %v254 = vld [vmem:[%s240 + $0x68] sm:$0xff]
        %v255 = vld [vmem:[%s240 + $0x70] sm:$0xff]
        %v256 = vld [vmem:[%s240 + $0x78] sm:$0xff]
        %s257 = scalar_lea.vmem [#allocation2], 256
        %v258 = vld [vmem:[%s257] sm:$0xff]
        %v259 = vld [vmem:[%s257 + $0x8] sm:$0xff]
        %v260 = vld [vmem:[%s257 + $0x10] sm:$0xff]
        %v261 = vld [vmem:[%s257 + $0x18] sm:$0xff]
        %v262 = vld [vmem:[%s257 + $0x20] sm:$0xff]
        %v263 = vld [vmem:[%s257 + $0x28] sm:$0xff]
        %v264 = vld [vmem:[%s257 + $0x30] sm:$0xff]
        %v265 = vld [vmem:[%s257 + $0x38] sm:$0xff]
        %v266 = vld [vmem:[%s257 + $0x40] sm:$0xff]
        %v267 = vld [vmem:[%s257 + $0x48] sm:$0xff]
        %v268 = vld [vmem:[%s257 + $0x50] sm:$0xff]
        %v269 = vld [vmem:[%s257 + $0x58] sm:$0xff]
        %v270 = vld [vmem:[%s257 + $0x60] sm:$0xff]
        %v271 = vld [vmem:[%s257 + $0x68] sm:$0xff]
        %v272 = vld [vmem:[%s257 + $0x70] sm:$0xff]
        %v273 = vld [vmem:[%s257 + $0x78] sm:$0xff]
        %v274 = vld [vmem:[%s210] sm:$0xff]
        %v275 = vld [vmem:[%s210 + $0x8] sm:$0xff]
        %vm276 = vcmask 130048
        %v278 = vsel %vm276, %v211, 0
        %v281 = vsel %vm276, %v212, 0
        %v284 = vsel %vm276, %v213, 0
        %v287 = vsel %vm276, %v214, 0
        %v290 = vsel %vm276, %v215, 0
        %v293 = vsel %vm276, %v216, 0
        %v296 = vsel %vm276, %v217, 0
        %v299 = vsel %vm276, %v218, 0
        %v302 = vsel %vm276, %v219, 0
        %v305 = vsel %vm276, %v220, 0
        %v308 = vsel %vm276, %v221, 0
        %v311 = vsel %vm276, %v222, 0
        %313 = vmatprep.subr.mxu0 0.0
        %314 = vmatpush1.msra.mxu0 %v274
        %315 = vmatprep.subr.mxu0 0.0
        %316 = vmatpush1.msra.mxu0 %v275
        %317 = vmatprep.subr.mxu0 0.0
        %318 = vmatpush1.msra.mxu0 0.0
        %319 = vmatprep.subr.mxu0 0.0
        %320 = vmatpush1.msra.mxu0 0.0
        %321 = vmatprep.subr.mxu0 0.0
        %322 = vmatpush1.msra.mxu0 0.0
        %323 = vmatprep.subr.mxu0 0.0
        %324 = vmatpush1.msra.mxu0 0.0
        %325 = vmatprep.subr.mxu0 0.0
        %326 = vmatpush1.msra.mxu0 0.0
        %327 = vmatprep.subr.mxu0 0.0
        %328 = vmatpush1.msra.mxu0 0.0
        %329 = vmatprep.subr.mxu0 0.0
        %330 = vmatpush1.msra.mxu0 0.0
        %331 = vmatprep.subr.mxu0 0.0
        %332 = vmatpush1.msra.mxu0 0.0
        %333 = vmatprep.subr.mxu0 0.0
        %334 = vmatpush1.msra.mxu0 0.0
        %335 = vmatprep.subr.mxu0 0.0
        %336 = vmatpush1.msra.mxu0 0.0
        %337 = vmatprep.subr.mxu0 0.0
        %338 = vmatpush1.msra.mxu0 0.0
        %339 = vmatprep.subr.mxu0 0.0
        %340 = vmatpush1.msra.mxu0 0.0
        %341 = vmatprep.subr.mxu0 0.0
        %342 = vmatpush1.msra.mxu0 0.0
        %343 = vmatprep.subr.mxu0 0.0
        %344 = vmatpush1.msra.mxu0 0.0
        %345 = vmatprep.subr.mxu0 0.0
        %346 = vmatpush1.msra.mxu0 0.0
        %347 = vmatprep.subr.mxu0 0.0
        %348 = vmatpush1.msra.mxu0 0.0
        %349 = vmatprep.subr.mxu0 0.0
        %350 = vmatpush1.msra.mxu0 0.0
        %351 = vmatprep.subr.mxu0 0.0
        %352 = vmatpush1.msra.mxu0 0.0
        %353 = vmatprep.subr.mxu0 0.0
        %354 = vmatpush1.msra.mxu0 0.0
        %355 = vmatprep.subr.mxu0 0.0
        %356 = vmatpush1.msra.mxu0 0.0
        %357 = vmatprep.subr.mxu0 0.0
        %358 = vmatpush1.msra.mxu0 0.0
        %359 = vmatprep.subr.mxu0 0.0
        %360 = vmatpush1.msra.mxu0 0.0
        %361 = vmatprep.subr.mxu0 0.0
        %362 = vmatpush1.msra.mxu0 0.0
        %363 = vmatprep.subr.mxu0 0.0
        %364 = vmatpush1.msra.mxu0 0.0
        %365 = vmatprep.subr.mxu0 0.0
        %366 = vmatpush1.msra.mxu0 0.0
        %367 = vmatprep.subr.mxu0 0.0
        %368 = vmatpush1.msra.mxu0 0.0
        %369 = vmatprep.subr.mxu0 0.0
        %370 = vmatpush1.msra.mxu0 0.0
        %371 = vmatprep.subr.mxu0 0.0
        %372 = vmatpush1.msra.mxu0 0.0
        %373 = vmatprep.subr.mxu0 0.0
        %374 = vmatpush1.msra.mxu0 0.0
        %375 = vmatprep.subr.mxu0 0.0
        %376 = vmatpush1.msra.mxu0 0.0
        %377 = vmatprep.mubr.f32.mxu0 0.0
        %378 = vmatmul.mubr.f32.gmra.mrb[0].mxu0 %v278
        %v379 = vpop.f32.mrb[0].mxu0
        %v380 = vadd.f32 0.0, %v379
        %v381 = vpop.f32.mrb[0].mxu0
        %382 = vmatprep.mubr.f32.mxu0 0.0
        %383 = vmatmul.mubr.f32.gmra.mrb[0].mxu0 %v281
        %v384 = vpop.f32.mrb[0].mxu0
        %v385 = vadd.f32 0.0, %v384
        %v386 = vpop.f32.mrb[0].mxu0
        %387 = vmatprep.mubr.f32.mxu0 0.0
        %388 = vmatmul.mubr.f32.gmra.mrb[0].mxu0 %v284
        %v389 = vpop.f32.mrb[0].mxu0
        %v390 = vadd.f32 0.0, %v389
        %v391 = vpop.f32.mrb[0].mxu0
        %392 = vmatprep.mubr.f32.mxu0 0.0
        %393 = vmatmul.mubr.f32.gmra.mrb[0].mxu0 %v287
        %v394 = vpop.f32.mrb[0].mxu0
        %v395 = vadd.f32 0.0, %v394
        %v396 = vpop.f32.mrb[0].mxu0
        %397 = vmatprep.mubr.f32.mxu0 0.0
        %398 = vmatmul.mubr.f32.gmra.mrb[0].mxu0 %v290
        %v399 = vpop.f32.mrb[0].mxu0
        %v400 = vadd.f32 0.0, %v399
        %v401 = vpop.f32.mrb[0].mxu0
        %402 = vmatprep.mubr.f32.mxu0 0.0
        %403 = vmatmul.mubr.f32.gmra.mrb[0].mxu0 %v293
        %v404 = vpop.f32.mrb[0].mxu0
        %v405 = vadd.f32 0.0, %v404
        %v406 = vpop.f32.mrb[0].mxu0
        %407 = vmatprep.mubr.f32.mxu0 0.0
        %408 = vmatmul.mubr.f32.gmra.mrb[0].mxu0 %v296
        %v409 = vpop.f32.mrb[0].mxu0
        %v410 = vadd.f32 0.0, %v409
        %v411 = vpop.f32.mrb[0].mxu0
        %412 = vmatprep.mubr.f32.mxu0 0.0
        %413 = vmatmul.mubr.f32.gmra.mrb[0].mxu0 %v299
        %v414 = vpop.f32.mrb[0].mxu0
        %v415 = vadd.f32 0.0, %v414
        %v416 = vpop.f32.mrb[0].mxu0
        %417 = vmatprep.mubr.f32.mxu0 0.0
        %418 = vmatmul.mubr.f32.gmra.mrb[0].mxu0 %v302
        %v419 = vpop.f32.mrb[0].mxu0
        %v420 = vadd.f32 0.0, %v419
        %v421 = vpop.f32.mrb[0].mxu0
        %422 = vmatprep.mubr.f32.mxu0 0.0
        %423 = vmatmul.mubr.f32.gmra.mrb[0].mxu0 %v305
        %v424 = vpop.f32.mrb[0].mxu0
        %v425 = vadd.f32 0.0, %v424
        %v426 = vpop.f32.mrb[0].mxu0
        %427 = vmatprep.mubr.f32.mxu0 0.0
        %428 = vmatmul.mubr.f32.gmra.mrb[0].mxu0 %v308
        %v429 = vpop.f32.mrb[0].mxu0
        %v430 = vadd.f32 0.0, %v429
        %v431 = vpop.f32.mrb[0].mxu0
        %432 = vmatprep.mubr.f32.mxu0 0.0
        %433 = vmatmul.mubr.f32.gmra.mrb[0].mxu0 %v311
        %v434 = vpop.f32.mrb[0].mxu0
        %v435 = vadd.f32 0.0, %v434
        %v436 = vpop.f32.mrb[0].mxu0
        %437 = vdwg.mxu0
        %vm438 = vcmask 523264
        %v440 = vsel %vm438, %v400, 0
        %v443 = vsel %vm438, %v405, 0
        %v446 = vsel %vm438, %v410, 0
        %v449 = vsel %vm438, %v415, 0
        %451 = vmatprep.subr.mxu0 %v242
        %452 = vmatpush1.msra.mxu0 %v241
        %453 = vmatprep.subr.mxu0 %v244
        %454 = vmatpush1.msra.mxu0 %v243
        %455 = vmatprep.subr.mxu0 %v246
        %456 = vmatpush1.msra.mxu0 %v245
        %457 = vmatprep.subr.mxu0 %v248
        %458 = vmatpush1.msra.mxu0 %v247
        %459 = vmatprep.subr.mxu0 %v250
        %460 = vmatpush1.msra.mxu0 %v249
        %461 = vmatprep.subr.mxu0 %v252
        %462 = vmatpush1.msra.mxu0 %v251
        %463 = vmatprep.subr.mxu0 %v254
        %464 = vmatpush1.msra.mxu0 %v253
        %465 = vmatprep.subr.mxu0 %v256
        %466 = vmatpush1.msra.mxu0 %v255
        %467 = vmatprep.subr.mxu0 0.0
        %468 = vmatpush1.msra.mxu0 0.0
        %469 = vmatprep.subr.mxu0 0.0
        %470 = vmatpush1.msra.mxu0 0.0
        %471 = vmatprep.subr.mxu0 0.0
        %472 = vmatpush1.msra.mxu0 0.0
        %473 = vmatprep.subr.mxu0 0.0
        %474 = vmatpush1.msra.mxu0 0.0
        %475 = vmatprep.subr.mxu0 0.0
        %476 = vmatpush1.msra.mxu0 0.0
        %477 = vmatprep.subr.mxu0 0.0
        %478 = vmatpush1.msra.mxu0 0.0
        %479 = vmatprep.subr.mxu0 0.0
        %480 = vmatpush1.msra.mxu0 0.0
        %481 = vmatprep.subr.mxu0 0.0
        %482 = vmatpush1.msra.mxu0 0.0
        %483 = vmatprep.subr.mxu0 0.0
        %484 = vmatpush1.msra.mxu0 0.0
        %485 = vmatprep.subr.mxu0 0.0
        %486 = vmatpush1.msra.mxu0 0.0
        %487 = vmatprep.subr.mxu0 0.0
        %488 = vmatpush1.msra.mxu0 0.0
        %489 = vmatprep.subr.mxu0 0.0
        %490 = vmatpush1.msra.mxu0 0.0
        %491 = vmatprep.subr.mxu0 0.0
        %492 = vmatpush1.msra.mxu0 0.0
        %493 = vmatprep.subr.mxu0 0.0
        %494 = vmatpush1.msra.mxu0 0.0
        %495 = vmatprep.subr.mxu0 0.0
        %496 = vmatpush1.msra.mxu0 0.0
        %497 = vmatprep.subr.mxu0 0.0
        %498 = vmatpush1.msra.mxu0 0.0
        %499 = vmatprep.subr.mxu0 0.0
        %500 = vmatpush1.msra.mxu0 0.0
        %501 = vmatprep.subr.mxu0 0.0
        %502 = vmatpush1.msra.mxu0 0.0
        %503 = vmatprep.subr.mxu0 0.0
        %504 = vmatpush1.msra.mxu0 0.0
        %505 = vmatprep.subr.mxu0 0.0
        %506 = vmatpush1.msra.mxu0 0.0
        %507 = vmatprep.subr.mxu0 0.0
        %508 = vmatpush1.msra.mxu0 0.0
        %509 = vmatprep.subr.mxu0 0.0
        %510 = vmatpush1.msra.mxu0 0.0
        %511 = vmatprep.subr.mxu0 0.0
        %512 = vmatpush1.msra.mxu0 0.0
        %513 = vmatprep.subr.mxu0 0.0
        %514 = vmatpush1.msra.mxu0 0.0
        %515 = vmatprep.mubr.f32.mxu0 0.0
        %516 = vmatmul.mubr.f32.gmra.mrb[0].mxu0 %v440
        %v517 = vpop.f32.mrb[0].mxu0
        %v518 = vadd.f32 0.0, %v517
        %v519 = vpop.f32.mrb[0].mxu0
        %v520 = vadd.f32 0.0, %v519
        %521 = vmatprep.mubr.f32.mxu0 0.0
        %522 = vmatmul.mubr.f32.gmra.mrb[0].mxu0 %v443
        %v523 = vpop.f32.mrb[0].mxu0
        %v524 = vadd.f32 0.0, %v523
        %v525 = vpop.f32.mrb[0].mxu0
        %v526 = vadd.f32 0.0, %v525
        %527 = vmatprep.mubr.f32.mxu0 0.0
        %528 = vmatmul.mubr.f32.gmra.mrb[0].mxu0 %v446
        %v529 = vpop.f32.mrb[0].mxu0
        %v530 = vadd.f32 0.0, %v529
        %v531 = vpop.f32.mrb[0].mxu0
        %v532 = vadd.f32 0.0, %v531
        %533 = vmatprep.mubr.f32.mxu0 0.0
        %534 = vmatmul.mubr.f32.gmra.mrb[0].mxu0 %v449
        %v535 = vpop.f32.mrb[0].mxu0
        %v536 = vadd.f32 0.0, %v535
        %v537 = vpop.f32.mrb[0].mxu0
        %v538 = vadd.f32 0.0, %v537
        %539 = vdwg.mxu0
        %v541 = vsel %vm438, %v380, 0
        %v544 = vsel %vm438, %v385, 0
        %v547 = vsel %vm438, %v390, 0
        %v550 = vsel %vm438, %v395, 0
        %552 = vmatprep.subr.mxu0 %v225
        %553 = vmatpush1.msra.mxu0 %v224
        %554 = vmatprep.subr.mxu0 %v227
        %555 = vmatpush1.msra.mxu0 %v226
        %556 = vmatprep.subr.mxu0 %v229
        %557 = vmatpush1.msra.mxu0 %v228
        %558 = vmatprep.subr.mxu0 %v231
        %559 = vmatpush1.msra.mxu0 %v230
        %560 = vmatprep.subr.mxu0 %v233
        %561 = vmatpush1.msra.mxu0 %v232
        %562 = vmatprep.subr.mxu0 %v235
        %563 = vmatpush1.msra.mxu0 %v234
        %564 = vmatprep.subr.mxu0 %v237
        %565 = vmatpush1.msra.mxu0 %v236
        %566 = vmatprep.subr.mxu0 %v239
        %567 = vmatpush1.msra.mxu0 %v238
        %568 = vmatprep.subr.mxu0 0.0
        %569 = vmatpush1.msra.mxu0 0.0
        %570 = vmatprep.subr.mxu0 0.0
        %571 = vmatpush1.msra.mxu0 0.0
        %572 = vmatprep.subr.mxu0 0.0
        %573 = vmatpush1.msra.mxu0 0.0
        %574 = vmatprep.subr.mxu0 0.0
        %575 = vmatpush1.msra.mxu0 0.0
        %576 = vmatprep.subr.mxu0 0.0
        %577 = vmatpush1.msra.mxu0 0.0
        %578 = vmatprep.subr.mxu0 0.0
        %579 = vmatpush1.msra.mxu0 0.0
        %580 = vmatprep.subr.mxu0 0.0
        %581 = vmatpush1.msra.mxu0 0.0
        %582 = vmatprep.subr.mxu0 0.0
        %583 = vmatpush1.msra.mxu0 0.0
        %584 = vmatprep.subr.mxu0 0.0
        %585 = vmatpush1.msra.mxu0 0.0
        %586 = vmatprep.subr.mxu0 0.0
        %587 = vmatpush1.msra.mxu0 0.0
        %588 = vmatprep.subr.mxu0 0.0
        %589 = vmatpush1.msra.mxu0 0.0
        %590 = vmatprep.subr.mxu0 0.0
        %591 = vmatpush1.msra.mxu0 0.0
        %592 = vmatprep.subr.mxu0 0.0
        %593 = vmatpush1.msra.mxu0 0.0
        %594 = vmatprep.subr.mxu0 0.0
        %595 = vmatpush1.msra.mxu0 0.0
        %596 = vmatprep.subr.mxu0 0.0
        %597 = vmatpush1.msra.mxu0 0.0
        %598 = vmatprep.subr.mxu0 0.0
        %599 = vmatpush1.msra.mxu0 0.0
        %600 = vmatprep.subr.mxu0 0.0
        %601 = vmatpush1.msra.mxu0 0.0
        %602 = vmatprep.subr.mxu0 0.0
        %603 = vmatpush1.msra.mxu0 0.0
        %604 = vmatprep.subr.mxu0 0.0
        %605 = vmatpush1.msra.mxu0 0.0
        %606 = vmatprep.subr.mxu0 0.0
        %607 = vmatpush1.msra.mxu0 0.0
        %608 = vmatprep.subr.mxu0 0.0
        %609 = vmatpush1.msra.mxu0 0.0
        %610 = vmatprep.subr.mxu0 0.0
        %611 = vmatpush1.msra.mxu0 0.0
        %612 = vmatprep.subr.mxu0 0.0
        %613 = vmatpush1.msra.mxu0 0.0
        %614 = vmatprep.subr.mxu0 0.0
        %615 = vmatpush1.msra.mxu0 0.0
        %616 = vmatprep.mubr.f32.mxu0 0.0
        %617 = vmatmul.mubr.f32.gmra.mrb[0].mxu0 %v541
        %v618 = vpop.f32.mrb[0].mxu0
        %v619 = vadd.f32 %v518, %v618
        %v620 = vpop.f32.mrb[0].mxu0
        %v621 = vadd.f32 %v520, %v620
        %622 = vmatprep.mubr.f32.mxu0 0.0
        %623 = vmatmul.mubr.f32.gmra.mrb[0].mxu0 %v544
        %v624 = vpop.f32.mrb[0].mxu0
        %v625 = vadd.f32 %v524, %v624
        %v626 = vpop.f32.mrb[0].mxu0
        %v627 = vadd.f32 %v526, %v626
        %628 = vmatprep.mubr.f32.mxu0 0.0
        %629 = vmatmul.mubr.f32.gmra.mrb[0].mxu0 %v547
        %v630 = vpop.f32.mrb[0].mxu0
        %v631 = vadd.f32 %v530, %v630
        %v632 = vpop.f32.mrb[0].mxu0
        %v633 = vadd.f32 %v532, %v632
        %634 = vmatprep.mubr.f32.mxu0 0.0
        %635 = vmatmul.mubr.f32.gmra.mrb[0].mxu0 %v550
        %v636 = vpop.f32.mrb[0].mxu0
        %v637 = vadd.f32 %v536, %v636
        %v638 = vpop.f32.mrb[0].mxu0
        %v639 = vadd.f32 %v538, %v638
        %640 = vdwg.mxu0
        %v642 = vsel %vm438, %v420, 0
        %v645 = vsel %vm438, %v425, 0
        %v648 = vsel %vm438, %v430, 0
        %v651 = vsel %vm438, %v435, 0
        %653 = vmatprep.subr.mxu0 %v259
        %654 = vmatpush1.msra.mxu0 %v258
        %655 = vmatprep.subr.mxu0 %v261
        %656 = vmatpush1.msra.mxu0 %v260
        %657 = vmatprep.subr.mxu0 %v263
        %658 = vmatpush1.msra.mxu0 %v262
        %659 = vmatprep.subr.mxu0 %v265
        %660 = vmatpush1.msra.mxu0 %v264
        %661 = vmatprep.subr.mxu0 %v267
        %662 = vmatpush1.msra.mxu0 %v266
        %663 = vmatprep.subr.mxu0 %v269
        %664 = vmatpush1.msra.mxu0 %v268
        %665 = vmatprep.subr.mxu0 %v271
        %666 = vmatpush1.msra.mxu0 %v270
        %667 = vmatprep.subr.mxu0 %v273
        %668 = vmatpush1.msra.mxu0 %v272
        %669 = vmatprep.subr.mxu0 0.0
        %670 = vmatpush1.msra.mxu0 0.0
        %671 = vmatprep.subr.mxu0 0.0
        %672 = vmatpush1.msra.mxu0 0.0
        %673 = vmatprep.subr.mxu0 0.0
        %674 = vmatpush1.msra.mxu0 0.0
        %675 = vmatprep.subr.mxu0 0.0
        %676 = vmatpush1.msra.mxu0 0.0
        %677 = vmatprep.subr.mxu0 0.0
        %678 = vmatpush1.msra.mxu0 0.0
        %679 = vmatprep.subr.mxu0 0.0
        %680 = vmatpush1.msra.mxu0 0.0
        %681 = vmatprep.subr.mxu0 0.0
        %682 = vmatpush1.msra.mxu0 0.0
        %683 = vmatprep.subr.mxu0 0.0
        %684 = vmatpush1.msra.mxu0 0.0
        %685 = vmatprep.subr.mxu0 0.0
        %686 = vmatpush1.msra.mxu0 0.0
        %687 = vmatprep.subr.mxu0 0.0
        %688 = vmatpush1.msra.mxu0 0.0
        %689 = vmatprep.subr.mxu0 0.0
        %690 = vmatpush1.msra.mxu0 0.0
        %691 = vmatprep.subr.mxu0 0.0
        %692 = vmatpush1.msra.mxu0 0.0
        %693 = vmatprep.subr.mxu0 0.0
        %694 = vmatpush1.msra.mxu0 0.0
        %695 = vmatprep.subr.mxu0 0.0
        %696 = vmatpush1.msra.mxu0 0.0
        %697 = vmatprep.subr.mxu0 0.0
        %698 = vmatpush1.msra.mxu0 0.0
        %699 = vmatprep.subr.mxu0 0.0
        %700 = vmatpush1.msra.mxu0 0.0
        %701 = vmatprep.subr.mxu0 0.0
        %702 = vmatpush1.msra.mxu0 0.0
        %703 = vmatprep.subr.mxu0 0.0
        %704 = vmatpush1.msra.mxu0 0.0
        %705 = vmatprep.subr.mxu0 0.0
        %706 = vmatpush1.msra.mxu0 0.0
        %707 = vmatprep.subr.mxu0 0.0
        %708 = vmatpush1.msra.mxu0 0.0
        %709 = vmatprep.subr.mxu0 0.0
        %710 = vmatpush1.msra.mxu0 0.0
        %711 = vmatprep.subr.mxu0 0.0
        %712 = vmatpush1.msra.mxu0 0.0
        %713 = vmatprep.subr.mxu0 0.0
        %714 = vmatpush1.msra.mxu0 0.0
        %715 = vmatprep.subr.mxu0 0.0
        %716 = vmatpush1.msra.mxu0 0.0
        %717 = vmatprep.mubr.f32.mxu0 0.0
        %718 = vmatmul.mubr.f32.gmra.mrb[0].mxu0 %v642
        %v719 = vpop.f32.mrb[0].mxu0
        %v720 = vadd.f32 0.0, %v719
        %v721 = vpop.f32.mrb[0].mxu0
        %v722 = vadd.f32 0.0, %v721
        %723 = vmatprep.mubr.f32.mxu0 0.0
        %724 = vmatmul.mubr.f32.gmra.mrb[0].mxu0 %v645
        %v725 = vpop.f32.mrb[0].mxu0
        %v726 = vadd.f32 0.0, %v725
        %v727 = vpop.f32.mrb[0].mxu0
        %v728 = vadd.f32 0.0, %v727
        %729 = vmatprep.mubr.f32.mxu0 0.0
        %730 = vmatmul.mubr.f32.gmra.mrb[0].mxu0 %v648
        %v731 = vpop.f32.mrb[0].mxu0
        %v732 = vadd.f32 0.0, %v731
        %v733 = vpop.f32.mrb[0].mxu0
        %v734 = vadd.f32 0.0, %v733
        %735 = vmatprep.mubr.f32.mxu0 0.0
        %736 = vmatmul.mubr.f32.gmra.mrb[0].mxu0 %v651
        %v737 = vpop.f32.mrb[0].mxu0
        %v738 = vadd.f32 0.0, %v737
        %v739 = vpop.f32.mrb[0].mxu0
        %v740 = vadd.f32 0.0, %v739
        %741 = vdwg.mxu0
        %v742 = vadd.f32 %v619, %v720
        %v743 = vadd.f32 %v621, %v722
        %v744 = vadd.f32 %v625, %v726
        %v745 = vadd.f32 %v627, %v728
        %v746 = vadd.f32 %v631, %v732
        %v747 = vadd.f32 %v633, %v734
        %v748 = vadd.f32 %v637, %v738
        %v749 = vadd.f32 %v639, %v740
        %v751 = vlaneseq
        %v752 = vshrl.u32 %v751, 7
        %v753 = vsub.s32 0, %v752
        %v754 = vrot.slane %v223, %v753
        %v755 = vlaneseq
        %v756 = vshrl.u32 %v755, 7
        %v757 = vsub.s32 1, %v756
        %v758 = vrot.slane %v223, %v757
        %v761 = vadd.f32 %v742, %v754
        %v762 = vadd.f32 %v743, %v758
        %v763 = vadd.f32 %v744, %v754
        %v764 = vadd.f32 %v745, %v758
        %v765 = vadd.f32 %v746, %v754
        %v766 = vadd.f32 %v747, %v758
        %v767 = vadd.f32 %v748, %v754
        %v768 = vadd.f32 %v749, %v758
        %vm769 = vcmp.gt.f32.partialorder %v761, 0.0
        %vm770 = vcmp.gt.f32.partialorder %v762, 0.0
        %vm771 = vcmp.gt.f32.partialorder %v763, 0.0
        %vm772 = vcmp.gt.f32.partialorder %v764, 0.0
        %vm773 = vcmp.gt.f32.partialorder %v765, 0.0
        %vm774 = vcmp.gt.f32.partialorder %v766, 0.0
        %vm775 = vcmp.gt.f32.partialorder %v767, 0.0
        %vm776 = vcmp.gt.f32.partialorder %v768, 0.0
        %v777 = vmin.f32 %v761, 0.0
        %v778 = vmin.f32 %v762, 0.0
        %v779 = vmin.f32 %v763, 0.0
        %v780 = vmin.f32 %v764, 0.0
        %v781 = vmin.f32 %v765, 0.0
        %v782 = vmin.f32 %v766, 0.0
        %v783 = vmin.f32 %v767, 0.0
        %v784 = vmin.f32 %v768, 0.0
        %v785 = vmul.f32 %v777, 1.442695
        %v786 = vpow.pop %v785
        %v787 = vmul.f32 %v778, 1.442695
        %v788 = vpow.pop %v787
        %v789 = vmul.f32 %v779, 1.442695
        %v790 = vpow.pop %v789
        %v791 = vmul.f32 %v780, 1.442695
        %v792 = vpow.pop %v791
        %v793 = vmul.f32 %v781, 1.442695
        %v794 = vpow.pop %v793
        %v795 = vmul.f32 %v782, 1.442695
        %v796 = vpow.pop %v795
        %v797 = vmul.f32 %v783, 1.442695
        %v798 = vpow.pop %v797
        %v799 = vmul.f32 %v784, 1.442695
        %v800 = vpow.pop %v799
        %v801 = vsub.f32 %v786, 1.0
        %v802 = vsub.f32 %v788, 1.0
        %v803 = vsub.f32 %v790, 1.0
        %v804 = vsub.f32 %v792, 1.0
        %v805 = vsub.f32 %v794, 1.0
        %v806 = vsub.f32 %v796, 1.0
        %v807 = vsub.f32 %v798, 1.0
        %v808 = vsub.f32 %v800, 1.0
        %v809 = vsel %vm769, %v761, %v801
        %v810 = vsel %vm770, %v762, %v802
        %v811 = vsel %vm771, %v763, %v803
        %v812 = vsel %vm772, %v764, %v804
        %v813 = vsel %vm773, %v765, %v805
        %v814 = vsel %vm774, %v766, %v806
        %v815 = vsel %vm775, %v767, %v807
        %v816 = vsel %vm776, %v768, %v808
        %817 = vst [vmem:[%s205] sm:$0xff] %v809
        %818 = vst [vmem:[%s205 + $0x8] sm:$0xff] %v810
        %819 = vst [vmem:[%s205 + $0x10] sm:$0xff] %v811
        %820 = vst [vmem:[%s205 + $0x18] sm:$0xff] %v812
        %821 = vst [vmem:[%s205 + $0x20] sm:$0xff] %v813
        %822 = vst [vmem:[%s205 + $0x28] sm:$0xff] %v814
        %823 = vst [vmem:[%s205 + $0x30] sm:$0xff] %v815
        %824 = vst [vmem:[%s205 + $0x38] sm:$0xff] %v816
        %s825 = sand.u32 %s116, 1
        %s826 = scalar_lea.sflag [#allocation4], %s825
        %s827 = sand.u32 %s116, 1
        %s828 = smul.addr %s827, 64
        %s829 = scalar_lea.vmem [#allocation5], %s828
        // Predicated region
        $region41: #{tpu_custom_call.1} parent=35 // pred_check
          %p830 = pneg %p126
        $region42: #{tpu_custom_call.1} parent=35 // pred_check_branch
          %832 = sbr.rel (%p830) target = $region44
        $region43: #{tpu_custom_call.1} parent=35 // pred_region
          %s834 = ssub.s32 1024, 1024
          %835 = vsyncadd %s826, %s834
          %s836 = smul.addr %s19, 8
          %s837 = smul.addr %s836, 128
          %s838 = scalar_lea.hbm %s4, %s837
          %s839 = sshll.u32 %s829, 4
          %s840 = int_to_ptr.vmem [resolvable:$true] %s839
          %845 = dma.vmem_to_hbm [thread:$0]  %s840, 1024, %s838, %s826, 256, 256, 16
        $region44: #{tpu_custom_call.1} parent=35 // pred_fallthru
          _
      $region36: #{tpu_custom_call.1} parent=5 // pred_fallthru
        _
      %p846 = scmp.le.s32.totalorder 2, %s14
      // Predicated region
      $region45: #{tpu_custom_call.1} parent=5 // pred_check
        %p847 = pneg %p846
      $region46: #{tpu_custom_call.1} parent=5 // pred_check_branch
        %849 = sbr.rel (%p847) target = $region48
      $region47: #{tpu_custom_call.1} parent=5 // pred_region
        %s850 = ssub.s32 %s14, 2
        // Predicated region
        $region49: #{tpu_custom_call.1} parent=47 // pred_check
          %p851 = pneg %p132
        $region50: #{tpu_custom_call.1} parent=47 // pred_check_branch
          %853 = sbr.rel (%p851) target = $region52
        $region51: #{tpu_custom_call.1} parent=47 // pred_region
          %s854 = sand.u32 %s117, 1
          %s855 = scalar_lea.sflag [#allocation4], %s854
          %s856 = sand.u32 %s117, 1
          %s857 = smul.addr %s856, 64
          %s858 = scalar_lea.vmem [#allocation5], %s857
          %859 = dma.done %s855, 1024
        $region52: #{tpu_custom_call.1} parent=47 // pred_fallthru
          _
      $region48: #{tpu_custom_call.1} parent=5 // pred_fallthru
        _
    $region6: #{tpu_custom_call.1} parent=1 // loop_footer
      %s18 = sadd.s32 1, %s14
    $region7: #{tpu_custom_call.1} parent=1 // loop_footer_branch
      %13 = sbr.rel target = $region3
    $region8: #{tpu_custom_call.1} parent=1 // loop_exit
      _
    %860 = vsyncpa [#allocation3], 1
    %s861 = scalar_lea.sflag [#allocation3], 1
    %862 = vsyncpa %s861, 1
    %863 = vsyncpa [#allocation4], 1
    %s864 = scalar_lea.sflag [#allocation4], 1
    %865 = vsyncpa %s864, 1

</llo_original>
